<compile_context>
chip_gen: v7x
topology: tpu7x:2x2x1
jax: 0.10.0
libtpu: 0.0.40
codegen_flags: <defaults>
</compile_context>

<pallas_src>
import functools

import numpy as np
import jax
import jax.numpy as jnp
from jax.experimental import pallas as pl
from jax.experimental.pallas import tpu as pltpu


def _med3(a, b, c):
    """Exact median of three (elementwise), 4 min/max ops."""
    return jnp.maximum(jnp.minimum(a, b), jnp.minimum(jnp.maximum(a, b), c))


def _col_index(lane, W):
    """Column index (j mod W) of each flattened-plane lane."""
    if (W & (W - 1)) == 0:            # power-of-two fast path (bitwise AND)
        return jnp.bitwise_and(lane, W - 1)
    return lane - (lane // W) * W


def _nbr(v, delta, size):
    """out[:, j] == v[:, j + delta] for all non-wrapping lanes.

    Single XLU lane rotation (pltpu.roll == np.roll semantics); the wrapped
    lanes are always overwritten by the caller's edge jnp.where.
    """
    return pltpu.roll(v, (-delta) % size, axis=1)


def _median2x2_kernel(x_ref, o_ref, *, H, W):
    """Lower median over 2x2 windows, stride 1, reflect pad (right/bottom by 1).

    x_ref / o_ref: (TILE_B, H*W) -- each row is one flattened image plane.
    """
    HW = H * W
    x = x_ref[...]
    # Batch-invariant masks at (1, HW); jnp.where broadcasts along sublanes.
    lane = jax.lax.broadcasted_iota(jnp.int32, (1, HW), 1)
    col = _col_index(lane, W)
    right_edge = col == (W - 1)
    bottom_row = lane >= (HW - W)

    def right_nb(v):
        # neighbor at (+0,+1); padded column W reflects to column W-2.
        r = _nbr(v, 1, HW)     # v[j+1]
        l = _nbr(v, -1, HW)    # v[j-1]
        return jnp.where(right_edge, l, r)

    def down_nb(v):
        # neighbor at (+1,+0); padded row H reflects to row H-2.
        d = _nbr(v, W, HW)     # v[j+W]
        u = _nbr(v, -W, HW)    # v[j-W]
        return jnp.where(bottom_row, u, d)

    a = x
    b = right_nb(x)
    c = down_nb(x)
    d = right_nb(c)            # (+1,+1) diagonal; composition handles the corner.
    lo1, hi1 = jnp.minimum(a, b), jnp.maximum(a, b)
    lo2, hi2 = jnp.minimum(c, d), jnp.maximum(c, d)
    # torch.median of 4 values returns the LOWER median (2nd smallest).
    o_ref[...] = jnp.minimum(jnp.maximum(lo1, lo2), jnp.minimum(hi1, hi2))


def _median3x3_kernel(x_ref, o_ref, *, H, W):
    """Median over 3x3 windows, stride 1, reflect pad 1 on every side.

    Column-sorted-triple formulation: sort each vertical triple once (shared
    by the three horizontally adjacent windows), then
        median9 = med3(max(lo_c-1,lo_c,lo_c+1),
                       med3(mid_c-1,mid_c,mid_c+1),
                       min(hi_c-1,hi_c,hi_c+1)).
    Each sorted column (lo, then hi, then mid) is consumed before the next
    one's neighbor shifts are produced, keeping ~6 block-sized values live.
    """
    HW = H * W
    x = x_ref[...]
    lane = jax.lax.broadcasted_iota(jnp.int32, (1, HW), 1)
    col = _col_index(lane, W)
    top_row = lane < W
    bottom_row = lane >= (HW - W)
    left_edge = col == 0
    right_edge = col == (W - 1)

    # Vertical neighbors with reflect padding (row -1 -> 1, row H -> H-2).
    u_raw = _nbr(x, -W, HW)    # x[j-W]
    d_raw = _nbr(x, W, HW)     # x[j+W]
    up = jnp.where(top_row, d_raw, u_raw)
    down = jnp.where(bottom_row, u_raw, d_raw)

    # Sort each vertical triple (up, x, down) -> (lo, mid, hi).
    a, b = jnp.minimum(up, x), jnp.maximum(up, x)
    b, c = jnp.minimum(b, down), jnp.maximum(b, down)
    lo, mid = jnp.minimum(a, b), jnp.maximum(a, b)
    hi = c

    def left_right(v):
        # neighbors at (0,-1)/(0,+1); padded col -1 -> 1, col W -> W-2.
        l = _nbr(v, -1, HW)    # v[j-1]
        r = _nbr(v, 1, HW)     # v[j+1]
        return jnp.where(left_edge, r, l), jnp.where(right_edge, l, r)

    lo_l, lo_r = left_right(lo)
    max_lo = jnp.maximum(jnp.maximum(lo_l, lo), lo_r)
    hi_l, hi_r = left_right(hi)
    min_hi = jnp.minimum(jnp.minimum(hi_l, hi), hi_r)
    mid_l, mid_r = left_right(mid)
    med_mid = _med3(mid_l, mid, mid_r)
    o_ref[...] = _med3(max_lo, med_mid, min_hi)


@functools.lru_cache(maxsize=1)
def _vmem_capacity_bytes():
    """Physical VMEM of the local TPU; conservative fallback if unavailable."""
    try:
        return int(pltpu.get_tpu_info().vmem_capacity_bytes)
    except Exception:
        return 64 << 20            # assume the smallest (v7x-sized) VMEM


def _plan_blocks(B, HW, itemsize):
    """Pick (tile_b, vmem_limit_bytes) for blocks of shape (tile_b, HW).

    - pack = sublane packing unit (8 f32 / 16 bf16 / 32 int8) so vregs are
      fully packed and stores unmasked whenever tile_b < B.
    - ~2 MiB blocks on 128-MiB-VMEM chips (v5e/v6e), ~1 MiB on v7x (64 MiB),
      keeping 4 pipeline buffers + ~6-7 live temporaries well inside budget.
    - If one block would cover the whole batch and the batch is large enough,
      split into >=2 grid steps so "parallel" can shard across v7x's 2 TCs.
    """
    pack = max(8, 32 // itemsize)
    row_bytes = HW * itemsize
    big_vmem = _vmem_capacity_bytes() >= (100 << 20)     # v5e / v6e: 128 MiB
    target_bytes = (2 << 20) if big_vmem else (1 << 20)
    base_limit = (64 << 20) if big_vmem else (32 << 20)
    limit_cap = (100 << 20) if big_vmem else (48 << 20)

    if B <= pack:
        tile_b = B                                   # block == full batch dim
    else:
        tile_b = max(pack, (target_bytes // max(1, row_bytes)) // pack * pack)
        if tile_b >= B:
            # One block would cover everything: split so the grid has >=2
            # steps (cheap everywhere, ~2x on v7x small batches).
            tile_b = (-(-B // 2) + pack - 1) // pack * pack
        tile_b = min(tile_b, B)

    # TODO(synk): for very large planes (row_bytes >~ target) add a second
    # grid axis over H*W with in-kernel halo handling instead of growing the
    # block; for now we only raise the scoped-VMEM limit.
    block_bytes = tile_b * row_bytes
    vmem_limit = min(limit_cap, max(base_limit, 14 * block_bytes))
    return tile_b, vmem_limit


def _run_median_pool(x, kernel_fn):
    """x: (N, C, H, W). Returns median-pooled (N, C, H, W), same dtype."""
    N, C, H, W = x.shape
    if H < 2 or W < 2:
        raise ValueError("reflect padding requires H >= 2 and W >= 2")
    B = N * C
    HW = H * W
    xf = x.reshape(B, HW)              # free reshape (row-major contiguous)
    tile_b, vmem_limit = _plan_blocks(B, HW, x.dtype.itemsize)

    out = pl.pallas_call(
        functools.partial(kernel_fn, H=H, W=W),
        out_shape=jax.ShapeDtypeStruct((B, HW), x.dtype),
        grid_spec=pltpu.PrefetchScalarGridSpec(
            num_scalar_prefetch=0,
            grid=(pl.cdiv(B, tile_b),),
            in_specs=[pl.BlockSpec((tile_b, HW), lambda i: (i, 0))],
            out_specs=pl.BlockSpec((tile_b, HW), lambda i: (i, 0)),
        ),
        compiler_params=pltpu.CompilerParams(
            dimension_semantics=("parallel",),   # shards across TCs on v7x
            vmem_limit_bytes=vmem_limit,
        ),
    )(xf)
    return out.reshape(N, C, H, W)


@jax.jit
def median_pool_2x2(x):
    return _run_median_pool(x, _median2x2_kernel)


@jax.jit
def median_pool_3x3(x):
    return _run_median_pool(x, _median3x3_kernel)


class RandomBlur:
    """Mirror of the PyTorch RandomBlur module (no learnable parameters)."""

    def __init__(self, blur_prob, blur2x2_prob):
        self.blur_prob = blur_prob
        self.blur2x2_prob = blur2x2_prob

    def __call__(self, x):
        return self.forward(x)

    def forward(self, x):
        # Host-side random branch selection, same as the PyTorch forward.
        perform_blur = np.random.rand() < self.blur_prob
        if perform_blur:
            blur2x2 = np.random.rand() < self.blur2x2_prob
            if blur2x2:
                blurred = median_pool_2x2(x)
            else:
                blurred = median_pool_3x3(x)
        else:
            blurred = x
        return blurred


def _ref_median_pool(x, k):
    """Pure-JAX reference (torch lower-median semantics)."""
    N, C, H, W = x.shape
    if k == 2:
        xp = jnp.pad(x, ((0, 0), (0, 0), (0, 1), (0, 1)), mode="reflect")
    else:
        xp = jnp.pad(x, ((0, 0), (0, 0), (1, 1), (1, 1)), mode="reflect")
    win = jnp.stack(
        [xp[:, :, dy:dy + H, dx:dx + W] for dy in range(k) for dx in range(k)],
        axis=-1)
    return jnp.sort(win, axis=-1)[..., (k * k - 1) // 2]


if __name__ == "__main__":
    np.random.seed(0)
    key = jax.random.PRNGKey(0)
    x = jax.random.normal(key, (2, 4, 16, 16), dtype=jnp.float32)

    # Module forward (random branch selection on host, blur always fires here).
    blur = RandomBlur(blur_prob=1.0, blur2x2_prob=0.5)
    out = blur(x)
    jax.block_until_ready(out)

    # Exercise and verify both median-pool kernels against a pure-JAX reference.
    y2 = median_pool_2x2(x)
    y3 = median_pool_3x3(x)
    jax.block_until_ready((y2, y3))
    np.testing.assert_allclose(np.asarray(y2), np.asarray(_ref_median_pool(x, 2)),
                               rtol=0, atol=0)
    np.testing.assert_allclose(np.asarray(y3), np.asarray(_ref_median_pool(x, 3)),
                               rtol=0, atol=0)

    # bf16 path (halves HBM traffic; native bf16 VALU on v6e/v7x) is exact
    # for a min/max median network -- verify dtype-preservation and values.
    xb = x.astype(jnp.bfloat16)
    y3b = median_pool_3x3(xb)
    jax.block_until_ready(y3b)
    assert y3b.dtype == jnp.bfloat16
    np.testing.assert_allclose(
        np.asarray(y3b.astype(jnp.float32)),
        np.asarray(_ref_median_pool(xb, 3).astype(jnp.float32)),
        rtol=0, atol=0)

    assert out.shape == x.shape and out.dtype == x.dtype

    print("KERNEL_OK")
</pallas_src>

<mosaic_0001>
module attributes {stable_mosaic.version = 11 : i64} {
  func.func @_median3x3_kernel(%arg0: i32, %arg1: memref<8x256xf32, #tpu.memory_space<vmem>>, %arg2: memref<8x256xf32, #tpu.memory_space<vmem>>) attributes {dimension_semantics = [#tpu.dimension_semantics<parallel>], iteration_bounds = array<i64: 1>, scalar_prefetch = 0 : i64, scratch_operands = 0 : i64, tpu.core_type = #tpu.core_type<tc>, window_params = [{transform_indices = @transform_0, window_bounds = array<i64: 8, 256>}, {transform_indices = @transform_1, window_bounds = array<i64: 8, 256>}]} {
    %c0 = arith.constant 0 : index
    %c0_0 = arith.constant 0 : index
    %0 = vector.load %arg1[%c0, %c0_0] : memref<8x256xf32, #tpu.memory_space<vmem>>, vector<8x256xf32>
    %1 = tpu.iota {dimensions = array<i32: 1>} : vector<1x256xi32>
    %c15_i32 = arith.constant 15 : i32
    %2 = vector.broadcast %c15_i32 : i32 to vector<1x256xi32>
    %3 = arith.andi %1, %2 : vector<1x256xi32>
    %c16_i32 = arith.constant 16 : i32
    %4 = vector.broadcast %c16_i32 : i32 to vector<1x256xi32>
    %5 = arith.cmpi slt, %1, %4 : vector<1x256xi32>
    %c240_i32 = arith.constant 240 : i32
    %6 = vector.broadcast %c240_i32 : i32 to vector<1x256xi32>
    %7 = arith.cmpi sge, %1, %6 : vector<1x256xi32>
    %c0_i32 = arith.constant 0 : i32
    %8 = vector.broadcast %c0_i32 : i32 to vector<1x256xi32>
    %9 = arith.cmpi eq, %3, %8 : vector<1x256xi32>
    %c15_i32_1 = arith.constant 15 : i32
    %10 = vector.broadcast %c15_i32_1 : i32 to vector<1x256xi32>
    %11 = arith.cmpi eq, %3, %10 : vector<1x256xi32>
    %c16_i32_2 = arith.constant 16 : i32
    %12 = tpu.dynamic_rotate %0 by %c16_i32_2 dim 1 : vector<8x256xf32>, i32 -> vector<8x256xf32>
    %c240_i32_3 = arith.constant 240 : i32
    %13 = tpu.dynamic_rotate %0 by %c240_i32_3 dim 1 : vector<8x256xf32>, i32 -> vector<8x256xf32>
    %14 = vector.shape_cast %5 : vector<1x256xi1> to vector<1x256xi1>
    %15 = vector.broadcast %14 : vector<1x256xi1> to vector<8x256xi1>
    %16 = arith.select %15, %13, %12 : vector<8x256xi1>, vector<8x256xf32>
    %17 = vector.shape_cast %7 : vector<1x256xi1> to vector<1x256xi1>
    %18 = vector.broadcast %17 : vector<1x256xi1> to vector<8x256xi1>
    %19 = arith.select %18, %12, %13 : vector<8x256xi1>, vector<8x256xf32>
    %20 = arith.minimumf %16, %0 : vector<8x256xf32>
    %21 = arith.maximumf %16, %0 : vector<8x256xf32>
    %22 = arith.minimumf %21, %19 : vector<8x256xf32>
    %23 = arith.maximumf %21, %19 : vector<8x256xf32>
    %24 = arith.minimumf %20, %22 : vector<8x256xf32>
    %25 = arith.maximumf %20, %22 : vector<8x256xf32>
    %c1_i32 = arith.constant 1 : i32
    %26 = tpu.dynamic_rotate %24 by %c1_i32 dim 1 : vector<8x256xf32>, i32 -> vector<8x256xf32>
    %c255_i32 = arith.constant 255 : i32
    %27 = tpu.dynamic_rotate %24 by %c255_i32 dim 1 : vector<8x256xf32>, i32 -> vector<8x256xf32>
    %28 = vector.shape_cast %9 : vector<1x256xi1> to vector<1x256xi1>
    %29 = vector.broadcast %28 : vector<1x256xi1> to vector<8x256xi1>
    %30 = arith.select %29, %27, %26 : vector<8x256xi1>, vector<8x256xf32>
    %31 = vector.shape_cast %11 : vector<1x256xi1> to vector<1x256xi1>
    %32 = vector.broadcast %31 : vector<1x256xi1> to vector<8x256xi1>
    %33 = arith.select %32, %26, %27 : vector<8x256xi1>, vector<8x256xf32>
    %34 = arith.maximumf %30, %24 : vector<8x256xf32>
    %35 = arith.maximumf %34, %33 : vector<8x256xf32>
    %c1_i32_4 = arith.constant 1 : i32
    %36 = tpu.dynamic_rotate %23 by %c1_i32_4 dim 1 : vector<8x256xf32>, i32 -> vector<8x256xf32>
    %c255_i32_5 = arith.constant 255 : i32
    %37 = tpu.dynamic_rotate %23 by %c255_i32_5 dim 1 : vector<8x256xf32>, i32 -> vector<8x256xf32>
    %38 = vector.shape_cast %9 : vector<1x256xi1> to vector<1x256xi1>
    %39 = vector.broadcast %38 : vector<1x256xi1> to vector<8x256xi1>
    %40 = arith.select %39, %37, %36 : vector<8x256xi1>, vector<8x256xf32>
    %41 = vector.shape_cast %11 : vector<1x256xi1> to vector<1x256xi1>
    %42 = vector.broadcast %41 : vector<1x256xi1> to vector<8x256xi1>
    %43 = arith.select %42, %36, %37 : vector<8x256xi1>, vector<8x256xf32>
    %44 = arith.minimumf %40, %23 : vector<8x256xf32>
    %45 = arith.minimumf %44, %43 : vector<8x256xf32>
    %c1_i32_6 = arith.constant 1 : i32
    %46 = tpu.dynamic_rotate %25 by %c1_i32_6 dim 1 : vector<8x256xf32>, i32 -> vector<8x256xf32>
    %c255_i32_7 = arith.constant 255 : i32
    %47 = tpu.dynamic_rotate %25 by %c255_i32_7 dim 1 : vector<8x256xf32>, i32 -> vector<8x256xf32>
    %48 = vector.shape_cast %9 : vector<1x256xi1> to vector<1x256xi1>
    %49 = vector.broadcast %48 : vector<1x256xi1> to vector<8x256xi1>
    %50 = arith.select %49, %47, %46 : vector<8x256xi1>, vector<8x256xf32>
    %51 = vector.shape_cast %11 : vector<1x256xi1> to vector<1x256xi1>
    %52 = vector.broadcast %51 : vector<1x256xi1> to vector<8x256xi1>
    %53 = arith.select %52, %46, %47 : vector<8x256xi1>, vector<8x256xf32>
    %54 = arith.minimumf %50, %25 : vector<8x256xf32>
    %55 = arith.maximumf %50, %25 : vector<8x256xf32>
    %56 = arith.minimumf %55, %53 : vector<8x256xf32>
    %57 = arith.maximumf %54, %56 : vector<8x256xf32>
    %58 = arith.minimumf %35, %57 : vector<8x256xf32>
    %59 = arith.maximumf %35, %57 : vector<8x256xf32>
    %60 = arith.minimumf %59, %45 : vector<8x256xf32>
    %61 = arith.maximumf %58, %60 : vector<8x256xf32>
    %c0_8 = arith.constant 0 : index
    %c0_9 = arith.constant 0 : index
    %62 = vector.load %arg2[%c0_8, %c0_9] : memref<8x256xf32, #tpu.memory_space<vmem>>, vector<8x256xf32>
    tpu.vector_store %arg2[%c0_8, %c0_9], %61 {strides = array<i32>} : memref<8x256xf32, #tpu.memory_space<vmem>>, vector<8x256xf32>,
    return
  }
  func.func @transform_0(%arg0: i32) -> (i32, i32) {
    %c0_i32 = arith.constant 0 : i32
    %c0_i32_0 = arith.constant 0 : i32
    return %arg0, %c0_i32 : i32, i32
  }
  func.func @transform_1(%arg0: i32) -> (i32, i32) {
    %c0_i32 = arith.constant 0 : i32
    %c0_i32_0 = arith.constant 0 : i32
    return %arg0, %c0_i32 : i32, i32
  }
}

</mosaic_0001>

<llo_original>
// kernel: median_pool_3x3.1
$region0: #{median_pool_3x3.1}
  #allocation0 [shape = 'u32[]', space=smem, size = 0x4, offset = 0x4, fixed_abs, tag = 'smem constant byte address 0x4 - core index']
  #allocation1 [shape = 'u32[144,128]{1,0:T(1,128)}', space=vmem, size = 0x12000, scoped, tag = 'internal scratch']
  %s0 = inlined_call_operand.vmem [shape: f32[8,256], index: 0, kind: input, shape index: {}]
  %s1 = inlined_call_operand.vmem [shape: f32[8,256], index: 1, kind: output, shape index: {}]
  %s2 = sld [smem:[#allocation0]]
  $region14: #{median_pool_3x3.1} parent=0
    _
  %s4 = ssub.s32 1, %s2
  %s5 = scalar_select 0, %s4, %s2
  // Predicated region
  $region2: #{median_pool_3x3.1} parent=0 // pred_check
    _
  $region3: #{median_pool_3x3.1} parent=0 // pred_check_branch
    %7 = sbr.rel (0) target = $region5
  $region4: #{median_pool_3x3.1} parent=0 // pred_region
    _
  $region5: #{median_pool_3x3.1} parent=0 // pred_fallthru
    _
  %v8 = vld [vmem:[%s0] sm:$0xff]
  %v9 = vld [vmem:[%s0 + $0x8] sm:$0xff]
  %v10 = vlaneseq
  %v11 = vand.u32 %v10, 127
  %v12 = vadd.s32 %v11, 128
  %v13 = vand.u32 %v11, 15
  %v14 = vand.u32 %v12, 15
  %vm15 = vcmp.lt.s32.totalorder %v11, 16
  %vm16 = vcmp.lt.s32.totalorder %v12, 16
  %vm17 = vcmp.ge.s32.totalorder %v11, 240
  %vm18 = vcmp.ge.s32.totalorder %v12, 240
  %vm19 = vcmp.eq.s32.totalorder %v13, 0
  %vm20 = vcmp.eq.s32.totalorder %v14, 0
  %vm21 = vcmp.eq.s32.totalorder %v13, 15
  %vm22 = vcmp.eq.s32.totalorder %v14, 15
  %23 = vrot.lane.b32.xlu0 %v8, 16
  %v24 = vpop.permute.xlu0 %23
  %25 = vrot.lane.b32.xlu0 %v9, 16
  %v26 = vpop.permute.xlu0 %25
  %v27 = vsel %vm15, %v24, %v26
  %v28 = vsel %vm15, %v26, %v24
  %29 = vrot.lane.b32.xlu0 %v8, 112
  %v30 = vpop.permute.xlu0 %29
  %31 = vrot.lane.b32.xlu0 %v9, 112
  %v32 = vpop.permute.xlu0 %31
  %vm33 = vcmp.lt.s32.totalorder %v11, 112
  %v34 = vsel %vm33, %v30, %v32
  %v35 = vsel %vm33, %v32, %v30
  %v36 = vsel %vm15, 1, 0
  %v37 = vsel %vm16, 1, 0
  %vm38 = vcmp.eq.s32.totalorder %v36, 1
  %vm39 = vcmp.eq.s32.totalorder %v37, 1
  %v40 = vsel %vm38, %v34, %v28
  %v41 = vsel %vm39, %v35, %v27
  %v42 = vsel %vm17, 1, 0
  %v43 = vsel %vm18, 1, 0
  %vm44 = vcmp.eq.s32.totalorder %v42, 1
  %vm45 = vcmp.eq.s32.totalorder %v43, 1
  %v46 = vsel %vm44, %v28, %v34
  %v47 = vsel %vm45, %v27, %v35
  %v48 = vmin.f32 %v40, %v8
  %v49 = vmin.f32 %v41, %v9
  %v50 = vmax.f32 %v40, %v8
  %v51 = vmax.f32 %v41, %v9
  %v52 = vmin.f32 %v50, %v46
  %v53 = vmin.f32 %v51, %v47
  %v54 = vmax.f32 %v50, %v46
  %v55 = vmax.f32 %v51, %v47
  %v56 = vmin.f32 %v48, %v52
  %v57 = vmin.f32 %v49, %v53
  %v58 = vmax.f32 %v48, %v52
  %v59 = vmax.f32 %v49, %v53
  %60 = vrot.lane.b32.xlu0 %v56, 1
  %v61 = vpop.permute.xlu0 %60
  %62 = vrot.lane.b32.xlu0 %v57, 1
  %v63 = vpop.permute.xlu0 %62
  %vm64 = vcmp.lt.s32.totalorder %v11, 1
  %v65 = vsel %vm64, %v61, %v63
  %v66 = vsel %vm64, %v63, %v61
  %67 = vrot.lane.b32.xlu0 %v56, 127
  %v68 = vpop.permute.xlu0 %67
  %69 = vrot.lane.b32.xlu0 %v57, 127
  %v70 = vpop.permute.xlu0 %69
  %vm71 = vcmp.lt.s32.totalorder %v11, 127
  %v72 = vsel %vm71, %v68, %v70
  %v73 = vsel %vm71, %v70, %v68
  %v74 = vsel %vm19, 1, 0
  %v75 = vsel %vm20, 1, 0
  %vm76 = vcmp.eq.s32.totalorder %v74, 1
  %vm77 = vcmp.eq.s32.totalorder %v75, 1
  %v78 = vsel %vm76, %v72, %v66
  %v79 = vsel %vm77, %v73, %v65
  %v80 = vsel %vm21, 1, 0
  %v81 = vsel %vm22, 1, 0
  %vm82 = vcmp.eq.s32.totalorder %v80, 1
  %vm83 = vcmp.eq.s32.totalorder %v81, 1
  %v84 = vsel %vm82, %v66, %v72
  %v85 = vsel %vm83, %v65, %v73
  %v86 = vmax.f32 %v78, %v56
  %v87 = vmax.f32 %v79, %v57
  %v88 = vmax.f32 %v86, %v84
  %v89 = vmax.f32 %v87, %v85
  %90 = vrot.lane.b32.xlu0 %v54, 1
  %v91 = vpop.permute.xlu0 %90
  %92 = vrot.lane.b32.xlu0 %v55, 1
  %v93 = vpop.permute.xlu0 %92
  %v94 = vsel %vm64, %v91, %v93
  %v95 = vsel %vm64, %v93, %v91
  %96 = vrot.lane.b32.xlu0 %v54, 127
  %v97 = vpop.permute.xlu0 %96
  %98 = vrot.lane.b32.xlu0 %v55, 127
  %v99 = vpop.permute.xlu0 %98
  %v100 = vsel %vm71, %v97, %v99
  %v101 = vsel %vm71, %v99, %v97
  %v102 = vsel %vm76, %v100, %v95
  %v103 = vsel %vm77, %v101, %v94
  %v104 = vsel %vm82, %v95, %v100
  %v105 = vsel %vm83, %v94, %v101
  %v106 = vmin.f32 %v102, %v54
  %v107 = vmin.f32 %v103, %v55
  %v108 = vmin.f32 %v106, %v104
  %v109 = vmin.f32 %v107, %v105
  %110 = vrot.lane.b32.xlu0 %v58, 1
  %v111 = vpop.permute.xlu0 %110
  %112 = vrot.lane.b32.xlu0 %v59, 1
  %v113 = vpop.permute.xlu0 %112
  %v114 = vsel %vm64, %v111, %v113
  %v115 = vsel %vm64, %v113, %v111
  %116 = vrot.lane.b32.xlu0 %v58, 127
  %v117 = vpop.permute.xlu0 %116
  %118 = vrot.lane.b32.xlu0 %v59, 127
  %v119 = vpop.permute.xlu0 %118
  %v120 = vsel %vm71, %v117, %v119
  %v121 = vsel %vm71, %v119, %v117
  %v122 = vsel %vm76, %v120, %v115
  %v123 = vsel %vm77, %v121, %v114
  %v124 = vsel %vm82, %v115, %v120
  %v125 = vsel %vm83, %v114, %v121
  %v126 = vmin.f32 %v122, %v58
  %v127 = vmin.f32 %v123, %v59
  %v128 = vmax.f32 %v122, %v58
  %v129 = vmax.f32 %v123, %v59
  %v130 = vmin.f32 %v128, %v124
  %v131 = vmin.f32 %v129, %v125
  %v132 = vmax.f32 %v126, %v130
  %v133 = vmax.f32 %v127, %v131
  %v134 = vmin.f32 %v88, %v132
  %v135 = vmin.f32 %v89, %v133
  %v136 = vmax.f32 %v88, %v132
  %v137 = vmax.f32 %v89, %v133
  %v138 = vmin.f32 %v136, %v108
  %v139 = vmin.f32 %v137, %v109
  %v140 = vmax.f32 %v134, %v138
  %v141 = vmax.f32 %v135, %v139
  %142 = vst [vmem:[%s1] sm:$0xff] %v140
  %143 = vst [vmem:[%s1 + $0x8] sm:$0xff] %v141
  // Predicated region
  $region6: #{median_pool_3x3.1} parent=0 // pred_check
    _
  $region7: #{median_pool_3x3.1} parent=0 // pred_check_branch
    %145 = sbr.rel (0) target = $region9
  $region8: #{median_pool_3x3.1} parent=0 // pred_region
    _
  $region9: #{median_pool_3x3.1} parent=0 // pred_fallthru
    _
  // Predicated region
  $region10: #{median_pool_3x3.1} parent=0 // pred_check
    _
  $region11: #{median_pool_3x3.1} parent=0 // pred_check_branch
    %147 = sbr.rel (0) target = $region13
  $region12: #{median_pool_3x3.1} parent=0 // pred_region
    _
  $region13: #{median_pool_3x3.1} parent=0 // pred_fallthru
    _

</llo_original>
